<compile_context>
chip_gen: v7x
topology: tpu7x:2x2x1
jax: 0.10.0
libtpu: 0.0.40
codegen_flags: <defaults>
</compile_context>

<pallas_src>
import jax
import jax.numpy as jnp
import numpy as np
from jax.experimental import pallas as pl
from jax.experimental.pallas import tpu as pltpu

VOCAB_SIZE = 1024  # wrapper hard-codes self.vocab_size = 1024
assert (VOCAB_SIZE & (VOCAB_SIZE - 1)) == 0, "bit-mask draw needs power-of-two vocab"

# 512K elems/block: 3 int32 arrays * 4 B * 2 (double buffer) ~= 12.6 MiB VMEM.
_MAX_BLOCK_ELEMS = 512 * 1024


def _masked_generate_kernel(seed_ref, codes_ref, mask_ref, out_ref):
    tr, tc = codes_ref.shape

    # Fold seed and tile offset into ONE scalar (SMEM/sreg math), so the
    # per-element path is just: local iota + add + 1 hash round + select.
    # int32 wrap for huge grids / >=2^31 elements is intentional and benign
    # for the hash -- do NOT "fix" this to int64 (halves VPU throughput).
    tile_id = pl.program_id(0) * pl.num_programs(1) + pl.program_id(1)
    base = seed_ref[0] * jnp.int32(0x3243F6A9) + tile_id * jnp.int32(tr * tc)

    # Tile-local linear counter (all int32 VPU ops).
    row = jax.lax.broadcasted_iota(jnp.int32, (tr, tc), 0)
    col = jax.lax.broadcasted_iota(jnp.int32, (tr, tc), 1)
    x = row * jnp.int32(tc) + col + base

    # Single xorshift-multiply round (counter-based PRNG, distribution-level
    # only).  Logical >>16 emulated as (arithmetic >>16) & 0xFFFF.  Take HIGH
    # bits of the product (bits 21..30) -- the best-mixed bits of a
    # multiplicative hash -- for the 10-bit uniform draw.
    x = (x ^ ((x >> 16) & 0xFFFF)) * jnp.int32(0x045D9F3B)
    generated = ((x >> 21) & (VOCAB_SIZE - 1)).astype(out_ref.dtype)

    # output = where(mask, generated, codes); mask compared in native dtype.
    out_ref[...] = jnp.where(mask_ref[...] != 0, generated, codes_ref[...])


def pretrained_transformer_wrapper_forward(codes, mask, seed=0, *, donate_codes=False):
    """codes, mask: [B, n_codebooks, S] -> generated codes [B, n_codebooks, S].

    donate_codes=True aliases the codes buffer to the output
    (input_output_aliases={1: 0}); only a net win when `codes` is a temp /
    donated buffer inside a surrounding jit.
    """
    assert codes.shape == mask.shape
    B, C, S = codes.shape
    total = B * C * S

    # ---- metadata-only 2-D view: no pad, no copy -------------------------
    view = None
    for lanes in (512, 256, 128):          # prefer a lane-dense slab
        if total % lanes == 0:
            view = (total // lanes, lanes)
            break
    if view is None:                       # fall back to native layout
        view = (B * C, S)
    R, L = view

    codes2d = codes.reshape(R, L)          # pure reshape of contiguous data
    mask2d = mask.reshape(R, L)            # native dtype, no cast pass
    seed_arr = jnp.asarray([seed], dtype=jnp.int32)

    # ---- tile selection ---------------------------------------------------
    itemsize = min(codes.dtype.itemsize, mask.dtype.itemsize)
    align = max(8, 32 // itemsize)         # sublane alignment for narrowest dtype

    tc = L if L <= 128 else min((L // 128) * 128, 2048)
    max_rows = max(1, _MAX_BLOCK_ELEMS // tc)
    if R <= align:
        tr = R                             # full-dim block (allowed)
    else:
        tr = max(align, (min(R, max_rows) // align) * align)

    grid = (pl.cdiv(R, tr), pl.cdiv(L, tc))
    # v7x megacore: make sure both TensorCores get tiles when possible.
    if grid[0] * grid[1] == 1 and R > align:
        tr = max(align, (pl.cdiv(R, 2) // align) * align)
        grid = (pl.cdiv(R, tr), pl.cdiv(L, tc))

    out2d = pl.pallas_call(
        _masked_generate_kernel,
        out_shape=jax.ShapeDtypeStruct((R, L), codes.dtype),  # no trailing astype
        grid_spec=pltpu.PrefetchScalarGridSpec(
            num_scalar_prefetch=1,                            # seed lands in SMEM
            grid=grid,
            in_specs=[
                pl.BlockSpec((tr, tc), lambda i, j, seed: (i, j)),  # codes
                pl.BlockSpec((tr, tc), lambda i, j, seed: (i, j)),  # mask (native dtype)
            ],
            out_specs=pl.BlockSpec((tr, tc), lambda i, j, seed: (i, j)),
        ),
        input_output_aliases=({1: 0} if donate_codes else {}),
        compiler_params=pltpu.CompilerParams(
            dimension_semantics=("parallel", "parallel"),     # shard tiles on v7x
            vmem_limit_bytes=32 * 1024 * 1024),
    )(seed_arr, codes2d, mask2d)

    return out2d.reshape(B, C, S)          # metadata-only


if __name__ == "__main__":
    key = jax.random.PRNGKey(0)
    k_codes, k_mask = jax.random.split(key)

    batch, n_codebooks, seq_len = 2, 4, 16

    codes = jax.random.randint(
        k_codes, (batch, n_codebooks, seq_len), 0, VOCAB_SIZE, dtype=jnp.int32)
    mask = jax.random.bernoulli(
        k_mask, 0.5, (batch, n_codebooks, seq_len)).astype(jnp.int32)

    codes_np = np.asarray(codes)
    mask_np = np.asarray(mask)

    outs = []
    for donate in (False, True):           # exercise both the plain and aliased paths
        out = pretrained_transformer_wrapper_forward(codes, mask, seed=0,
                                                     donate_codes=donate)
        out = jax.block_until_ready(out)
        out_np = np.asarray(out)

        assert out_np.shape == codes_np.shape and out.dtype == codes.dtype
        # Unmasked positions pass through unchanged; all outputs in-vocab.
        assert np.all(np.where(mask_np == 0, out_np == codes_np, True))
        assert np.all((out_np >= 0) & (out_np < VOCAB_SIZE))
        outs.append(out_np)

    # Same seed -> identical output regardless of aliasing.
    assert np.array_equal(outs[0], outs[1])
    # Original codes buffer untouched by the donate path.
    assert np.array_equal(np.asarray(codes), codes_np)

    print("KERNEL_OK")
</pallas_src>

<mosaic_0001>
module attributes {stable_mosaic.version = 11 : i64} {
  func.func @_masked_generate_kernel(%arg0: i32, %arg1: i32, %arg2: memref<1xi32, #tpu.memory_space<smem>>, %arg3: memref<1x128xi32, #tpu.memory_space<vmem>>, %arg4: memref<1x128xi32, #tpu.memory_space<vmem>>, %arg5: memref<1x128xi32, #tpu.memory_space<vmem>>) attributes {dimension_semantics = [#tpu.dimension_semantics<parallel>, #tpu.dimension_semantics<parallel>], iteration_bounds = array<i64: 1, 1>, scalar_prefetch = 1 : i64, scratch_operands = 0 : i64, tpu.core_type = #tpu.core_type<tc>, window_params = [{transform_indices = @transform_0, window_bounds = array<i64: 1, 128>}, {transform_indices = @transform_1, window_bounds = array<i64: 1, 128>}, {transform_indices = @transform_2, window_bounds = array<i64: 1, 128>}]} {
    %c1_i32 = arith.constant 1 : i32
    %0 = arith.muli %arg0, %c1_i32 : i32
    %1 = arith.addi %0, %arg1 : i32
    %c0 = arith.constant 0 : index
    %2 = memref.load %arg2[%c0] : memref<1xi32, #tpu.memory_space<smem>>
    %c843314857_i32 = arith.constant 843314857 : i32
    %3 = arith.muli %2, %c843314857_i32 : i32
    %c128_i32 = arith.constant 128 : i32
    %4 = arith.muli %1, %c128_i32 : i32
    %5 = arith.addi %3, %4 : i32
    %6 = tpu.iota {dimensions = array<i32: 0>} : vector<1x128xi32>
    %7 = tpu.iota {dimensions = array<i32: 1>} : vector<1x128xi32>
    %c128_i32_0 = arith.constant 128 : i32
    %8 = vector.broadcast %c128_i32_0 : i32 to vector<1x128xi32>
    %9 = arith.muli %6, %8 : vector<1x128xi32>
    %10 = arith.addi %9, %7 : vector<1x128xi32>
    %11 = vector.broadcast %5 : i32 to vector<1x128xi32>
    %12 = arith.addi %10, %11 : vector<1x128xi32>
    %c16_i32 = arith.constant 16 : i32
    %13 = vector.broadcast %c16_i32 : i32 to vector<1x128xi32>
    %14 = arith.shrsi %12, %13 : vector<1x128xi32>
    %c65535_i32 = arith.constant 65535 : i32
    %15 = vector.broadcast %c65535_i32 : i32 to vector<1x128xi32>
    %16 = arith.andi %14, %15 : vector<1x128xi32>
    %17 = arith.xori %12, %16 : vector<1x128xi32>
    %c73244475_i32 = arith.constant 73244475 : i32
    %18 = vector.broadcast %c73244475_i32 : i32 to vector<1x128xi32>
    %19 = arith.muli %17, %18 : vector<1x128xi32>
    %c21_i32 = arith.constant 21 : i32
    %20 = vector.broadcast %c21_i32 : i32 to vector<1x128xi32>
    %21 = arith.shrsi %19, %20 : vector<1x128xi32>
    %c1023_i32 = arith.constant 1023 : i32
    %22 = vector.broadcast %c1023_i32 : i32 to vector<1x128xi32>
    %23 = arith.andi %21, %22 : vector<1x128xi32>
    %c0_1 = arith.constant 0 : index
    %c0_2 = arith.constant 0 : index
    %24 = vector.load %arg4[%c0_1, %c0_2] : memref<1x128xi32, #tpu.memory_space<vmem>>, vector<1x128xi32>
    %c0_i32 = arith.constant 0 : i32
    %25 = vector.broadcast %c0_i32 : i32 to vector<1x128xi32>
    %26 = arith.cmpi ne, %24, %25 : vector<1x128xi32>
    %c0_3 = arith.constant 0 : index
    %c0_4 = arith.constant 0 : index
    %27 = vector.load %arg3[%c0_3, %c0_4] : memref<1x128xi32, #tpu.memory_space<vmem>>, vector<1x128xi32>
    %28 = arith.select %26, %23, %27 : vector<1x128xi1>, vector<1x128xi32>
    %c0_5 = arith.constant 0 : index
    %c0_6 = arith.constant 0 : index
    %29 = vector.load %arg5[%c0_5, %c0_6] : memref<1x128xi32, #tpu.memory_space<vmem>>, vector<1x128xi32>
    tpu.vector_store %arg5[%c0_5, %c0_6], %28 {strides = array<i32>} : memref<1x128xi32, #tpu.memory_space<vmem>>, vector<1x128xi32>,
    return
  }
  func.func @transform_0(%arg0: i32, %arg1: i32, %arg2: memref<1xi32, #tpu.memory_space<smem>>) -> (i32, i32) {
    %c0_i32 = arith.constant 0 : i32
    return %arg0, %arg1 : i32, i32
  }
  func.func @transform_1(%arg0: i32, %arg1: i32, %arg2: memref<1xi32, #tpu.memory_space<smem>>) -> (i32, i32) {
    %c0_i32 = arith.constant 0 : i32
    return %arg0, %arg1 : i32, i32
  }
  func.func @transform_2(%arg0: i32, %arg1: i32, %arg2: memref<1xi32, #tpu.memory_space<smem>>) -> (i32, i32) {
    %c0_i32 = arith.constant 0 : i32
    return %arg0, %arg1 : i32, i32
  }
}

</mosaic_0001>

<llo_original>
// kernel: tpu_custom_call.1
$region0: #{tpu_custom_call.1}
  #allocation0 [shape = 'u32[]', space=smem, size = 0x4, offset = 0x4, fixed_abs, tag = 'smem constant byte address 0x4 - core index']
  #allocation1 [shape = 'u32[144,128]{1,0:T(1,128)}', space=vmem, size = 0x12000, scoped, tag = 'internal scratch']
  #allocation2 [shape = 's32[1]{0}', space=sflag, size = 0x4, scoped, tag = 'scoped memory for tpu_custom_call.1']
  #allocation3 [shape = 's32[1]{0:T(128)S(6)}', space=smem, size = 0x200, scoped, tag = 'prefetched SMEM operand 0']
  %s0 = inlined_call_operand.<no memory space> [shape: s32[1], index: 0, kind: input, shape index: {}]
  %s1 = inlined_call_operand.vmem [shape: s32[1,128], index: 1, kind: input, shape index: {}]
  %s2 = inlined_call_operand.vmem [shape: s32[1,128], index: 2, kind: input, shape index: {}]
  %s3 = inlined_call_operand.hbm [shape: s32[1,128], index: 3, kind: output, shape index: {}]
  %s4 = sld [smem:[#allocation0]]
  $region18: #{tpu_custom_call.1} parent=0
    _
  %s6 = ssub.s32 1, %s4
  %s7 = scalar_select 0, %s6, %s4
  %8 = sst [smem:[#allocation3]] %s0
  $region1: #{tpu_custom_call.1} parent=0
    #allocation4 [shape = 'u8[512]{0}', space=vmem, size = 0x400, scoped, tag = 'output window, operand 0, single buffered']
    #allocation5 [shape = 's32[1]{0}', space=sflag, size = 0x4, scoped, tag = 'scoped memory for tpu_custom_call.1']
    %9 = vsyncpa [#allocation5], 0
    // Predicated region
    $region2: #{tpu_custom_call.1} parent=1 // pred_check
      _
    $region3: #{tpu_custom_call.1} parent=1 // pred_check_branch
      %11 = sbr.rel (0) target = $region5
    $region4: #{tpu_custom_call.1} parent=1 // pred_region
      _
    $region5: #{tpu_custom_call.1} parent=1 // pred_fallthru
      _
    // Predicated region
    $region6: #{tpu_custom_call.1} parent=1 // pred_check
      _
    $region7: #{tpu_custom_call.1} parent=1 // pred_check_branch
      %13 = sbr.rel (0) target = $region9
    $region8: #{tpu_custom_call.1} parent=1 // pred_region
      _
    $region9: #{tpu_custom_call.1} parent=1 // pred_fallthru
      _
    %s14 = sadd.s32 0, 0
    %s15 = sld [smem:[#allocation3]]
    %s16 = smul.u32 %s15, 843314857
    %s17 = smul.u32 %s14, 128
    %s18 = sadd.s32 %s16, %s17
    %v19 = vlaneseq
    %v20 = vshrl.u32 %v19, 7
    %v21 = vlaneseq
    %v22 = vand.u32 %v21, 127
    %v23 = vmul.u32 %v20, 128
    %v24 = vadd.s32 %v23, %v22
    %v25 = vstv %s18
    %v26 = vadd.s32 %v24, %v25
    %v27 = vshra.s32 %v26, 16
    %v28 = vand.u32 %v27, 65535
    %v29 = vxor.u32 %v26, %v28
    %v30 = vmul.u32 %v29, 73244475
    %v31 = vshra.s32 %v30, 21
    %v32 = vand.u32 %v31, 1023
    %v33 = vld [vmem:[%s2] sm:$0x1]
    %vm34 = vcmp.ne.s32.totalorder %v33, 0
    %v35 = vld [vmem:[%s1] sm:$0x1]
    %v36 = vsel %vm34, %v32, %v35
    %37 = vst [vmem:[#allocation4] sm:$0x1] %v36
    // Predicated region
    $region10: #{tpu_custom_call.1} parent=1 // pred_check
      _
    $region11: #{tpu_custom_call.1} parent=1 // pred_check_branch
      %39 = sbr.rel (0) target = $region13
    $region12: #{tpu_custom_call.1} parent=1 // pred_region
      %s41 = ssub.s32 16, 16
      %42 = vsyncadd [#allocation5], %s41
      %s44 = sshll.u32 [#allocation4], 4
      %s45 = int_to_ptr.vmem [resolvable:$true] %s44
      %47 = dma.vmem_to_hbm [thread:$0]  %s45, 16, %s3, [#allocation5]
    $region13: #{tpu_custom_call.1} parent=1 // pred_fallthru
      _
    // Predicated region
    $region14: #{tpu_custom_call.1} parent=1 // pred_check
      _
    $region15: #{tpu_custom_call.1} parent=1 // pred_check_branch
      %49 = sbr.rel (0) target = $region17
    $region16: #{tpu_custom_call.1} parent=1 // pred_region
      %50 = dma.done [#allocation5], 16
    $region17: #{tpu_custom_call.1} parent=1 // pred_fallthru
      _
    %51 = vsyncpa [#allocation5], 1

</llo_original>
